<compile_context>
chip_gen: v5e
topology: v5e:2x2
jax: 0.10.0
libtpu: 0.0.40
codegen_flags: <defaults>
</compile_context>

<pallas_src>
import jax
import jax.numpy as jnp
from jax.experimental import pallas as pl
from jax.experimental.pallas import tpu as pltpu


def _round_up(n, m):
    return -(-n // m) * m


def mlp_kernel(x_ref, w1_ref, b1_ref, w2_ref, b2_ref, o_ref):
    # x arrives f32 from HBM; cast to bf16 in-kernel (VPU) for the MXU's native bf16 path.
    x = x_ref[...].astype(jnp.bfloat16)
    # linear1: [TB, D](bf16) @ [D, Hp](bf16) -> f32 accumulate
    h = jnp.dot(x, w1_ref[...], preferred_element_type=jnp.float32)
    h = h + b1_ref[...]
    # sigmoid via tanh identity: one EUP transcendental, muls/adds on the VALU (has slack)
    h = 0.5 * (jnp.tanh(0.5 * h) + 1.0)
    # linear2: bf16 x bf16 -> f32 (single-pass MXU); padded W2 rows/cols are zero.
    logits = jnp.dot(h.astype(jnp.bfloat16), w2_ref[...],
                     preferred_element_type=jnp.float32)
    # b2 carries -1e30 in padded output columns -> those logits vanish under the softmax.
    logits = logits + b2_ref[...]
    # softmax over the feature axis (lane-dense [TB, 128] tile)
    m = jnp.max(logits, axis=-1, keepdims=True)
    e = jnp.exp(logits - m)
    s = jnp.sum(e, axis=-1, keepdims=True)
    o_ref[...] = (e / s).astype(o_ref.dtype)  # exact divide: rows sum to 1 to f32 precision


def prepare_params(w1, b1, w2, b2):
    """Pad/cast parameters once (cache the result; do NOT call per forward).

    w1:[D,H], b1:[1,H], w2:[H,O], b2:[1,O]  (already transposed vs PyTorch layout).
    """
    D, H = w1.shape
    H2, O = w2.shape
    assert H2 == H and b1.shape == (1, H) and b2.shape == (1, O)

    Hp = _round_up(H, 128)   # 200 -> 256, lane-dense hidden
    Op = _round_up(O, 128)   # 5   -> 128, lane-dense output

    w1p = jnp.pad(w1, ((0, 0), (0, Hp - H))).astype(jnp.bfloat16)
    b1p = jnp.pad(b1, ((0, 0), (0, Hp - H))).astype(jnp.float32)
    # zero rows (padded hidden units contribute nothing) and zero cols (padded outputs)
    w2p = jnp.pad(w2, ((0, Hp - H), (0, Op - O))).astype(jnp.bfloat16)
    # padded output columns get a huge negative bias -> exp() underflows to 0 in the softmax
    b2p = jnp.pad(b2.astype(jnp.float32), ((0, 0), (0, Op - O)),
                  constant_values=-1e30)
    return {"w1": w1p, "b1": b1p, "w2": w2p, "b2": b2p,
            "D": D, "H": H, "O": O, "Hp": Hp, "Op": Op}


def neural_net_forward(x, params, *, block_b=1024):
    """x:[B,D] f32 -> softmax probs [B,O] f32."""
    w1p, b1p, w2p, b2p = params["w1"], params["b1"], params["w2"], params["b2"]
    D, O, Hp, Op = params["D"], params["O"], params["Hp"], params["Op"]
    B, Dx = x.shape
    assert Dx == D

    # Batch tiling: TB rows per grid step (>= 8 sublanes); pad B up to a multiple of TB.
    TB = block_b if B >= block_b else _round_up(B, 8)
    Bp = _round_up(B, TB)
    if Bp != B:
        x = jnp.pad(x, ((0, Bp - B), (0, 0)))
    x = x.astype(jnp.float32)

    out = pl.pallas_call(
        mlp_kernel,
        out_shape=jax.ShapeDtypeStruct((Bp, Op), jnp.float32),
        grid=(Bp // TB,),
        in_specs=[
            pl.BlockSpec((TB, D), lambda i: (i, 0)),    # x tile marches over batch (f32)
            pl.BlockSpec((D, Hp), lambda i: (0, 0)),    # W1 (bf16) resident across steps
            pl.BlockSpec((1, Hp), lambda i: (0, 0)),    # b1 resident
            pl.BlockSpec((Hp, Op), lambda i: (0, 0)),   # W2 (bf16) resident
            pl.BlockSpec((1, Op), lambda i: (0, 0)),    # b2 resident (-1e30 in padded cols)
        ],
        out_specs=pl.BlockSpec((TB, Op), lambda i: (i, 0)),  # lane-dense [TB, 128] stores
        compiler_params=pltpu.CompilerParams(
            dimension_semantics=("parallel",),  # shards batch tiles across TCs on v7x
        ),
    )(x, w1p, b1p, w2p, b2p)
    return out[:B, :O]


def init_params(key, input_dim=1024, hidden_dim=200, output_dim=5):
    # Deterministic init mimicking torch.nn.Linear default (uniform +/- 1/sqrt(fan_in)).
    k1, k2, k3, k4 = jax.random.split(key, 4)
    bound1 = 1.0 / jnp.sqrt(input_dim)
    bound2 = 1.0 / jnp.sqrt(hidden_dim)
    w1 = jax.random.uniform(k1, (input_dim, hidden_dim), jnp.float32, -bound1, bound1)
    b1 = jax.random.uniform(k2, (1, hidden_dim), jnp.float32, -bound1, bound1)
    w2 = jax.random.uniform(k3, (hidden_dim, output_dim), jnp.float32, -bound2, bound2)
    b2 = jax.random.uniform(k4, (1, output_dim), jnp.float32, -bound2, bound2)
    return w1, b1, w2, b2


if __name__ == "__main__":
    input_dim, hidden_dim, output_dim = 1024, 200, 5
    batch = 2

    key = jax.random.PRNGKey(0)
    kx, kp = jax.random.split(key)
    x = jax.random.normal(kx, (batch, input_dim), jnp.float32)
    w1, b1, w2, b2 = init_params(kp, input_dim, hidden_dim, output_dim)

    params = prepare_params(w1, b1, w2, b2)   # one-time pad/cast (cacheable)
    out = neural_net_forward(x, params)
    out = jax.block_until_ready(out)

    # Reference matching the kernel's numerics (bf16-rounded x/W1, bf16-rounded h/W2).
    xb = x.astype(jnp.bfloat16).astype(jnp.float32)
    w1b = w1.astype(jnp.bfloat16).astype(jnp.float32)
    h_ref = jax.nn.sigmoid(xb @ w1b + b1)
    hb = h_ref.astype(jnp.bfloat16).astype(jnp.float32)
    w2b = w2.astype(jnp.bfloat16).astype(jnp.float32)
    ref = jax.nn.softmax(hb @ w2b + b2, axis=1)

    # Pure f32 reference (PyTorch semantics) for a coarser sanity check.
    ref32 = jax.nn.softmax(jax.nn.sigmoid(x @ w1 + b1) @ w2 + b2, axis=1)

    assert out.shape == (batch, output_dim)
    assert jnp.allclose(out, ref, atol=2e-3, rtol=2e-3)
    assert jnp.allclose(out, ref32, atol=2e-2, rtol=2e-2)
    assert jnp.allclose(jnp.sum(out, axis=1), 1.0, atol=1e-5)

    print("KERNEL_OK")
</pallas_src>

<mosaic_0001>
module attributes {stable_mosaic.version = 11 : i64} {
  func.func @mlp_kernel(%arg0: i32, %arg1: memref<8x1024xf32, #tpu.memory_space<vmem>>, %arg2: memref<1024x256xbf16, #tpu.memory_space<vmem>>, %arg3: memref<1x256xf32, #tpu.memory_space<vmem>>, %arg4: memref<256x128xbf16, #tpu.memory_space<vmem>>, %arg5: memref<1x128xf32, #tpu.memory_space<vmem>>, %arg6: memref<8x128xf32, #tpu.memory_space<vmem>>) attributes {dimension_semantics = [#tpu.dimension_semantics<parallel>], iteration_bounds = array<i64: 1>, scalar_prefetch = 0 : i64, scratch_operands = 0 : i64, tpu.core_type = #tpu.core_type<tc>, window_params = [{transform_indices = @transform_0, window_bounds = array<i64: 8, 1024>}, {pipeline_mode = #tpu.pipeline_mode<synchronous>, transform_indices = @transform_1, window_bounds = array<i64: 1024, 256>}, {pipeline_mode = #tpu.pipeline_mode<synchronous>, transform_indices = @transform_2, window_bounds = array<i64: 1, 256>}, {pipeline_mode = #tpu.pipeline_mode<synchronous>, transform_indices = @transform_3, window_bounds = array<i64: 256, 128>}, {pipeline_mode = #tpu.pipeline_mode<synchronous>, transform_indices = @transform_4, window_bounds = array<i64: 1, 128>}, {transform_indices = @transform_5, window_bounds = array<i64: 8, 128>}]} {
    %c0 = arith.constant 0 : index
    %c0_0 = arith.constant 0 : index
    %0 = vector.load %arg1[%c0, %c0_0] : memref<8x1024xf32, #tpu.memory_space<vmem>>, vector<8x1024xf32>
    %1 = arith.truncf %0 : vector<8x1024xf32> to vector<8x1024xbf16>
    %c0_1 = arith.constant 0 : index
    %c0_2 = arith.constant 0 : index
    %2 = vector.load %arg2[%c0_1, %c0_2] : memref<1024x256xbf16, #tpu.memory_space<vmem>>, vector<1024x256xbf16>
    %cst = arith.constant dense<0.000000e+00> : vector<8x256xf32>
    %3 = tpu.matmul %1, %2, %cst {dimension_numbers = #tpu.dot_dimension_numbers<[1], [0], [0], [1], [0, 0, 1, 1], [], []>} : vector<8x1024xbf16>, vector<1024x256xbf16>, vector<8x256xf32> -> vector<8x256xf32>
    %c0_3 = arith.constant 0 : index
    %c0_4 = arith.constant 0 : index
    %4 = vector.load %arg3[%c0_3, %c0_4] : memref<1x256xf32, #tpu.memory_space<vmem>>, vector<1x256xf32>
    %5 = vector.broadcast %4 : vector<1x256xf32> to vector<8x256xf32>
    %6 = arith.addf %3, %5 : vector<8x256xf32>
    %cst_5 = arith.constant 5.000000e-01 : f32
    %7 = vector.broadcast %cst_5 : f32 to vector<8x256xf32>
    %8 = arith.mulf %7, %6 : vector<8x256xf32>
    %9 = math.tanh %8 : vector<8x256xf32>
    %cst_6 = arith.constant 1.000000e+00 : f32
    %10 = vector.broadcast %cst_6 : f32 to vector<8x256xf32>
    %11 = arith.addf %9, %10 : vector<8x256xf32>
    %cst_7 = arith.constant 5.000000e-01 : f32
    %12 = vector.broadcast %cst_7 : f32 to vector<8x256xf32>
    %13 = arith.mulf %12, %11 : vector<8x256xf32>
    %14 = arith.truncf %13 : vector<8x256xf32> to vector<8x256xbf16>
    %c0_8 = arith.constant 0 : index
    %c0_9 = arith.constant 0 : index
    %15 = vector.load %arg4[%c0_8, %c0_9] : memref<256x128xbf16, #tpu.memory_space<vmem>>, vector<256x128xbf16>
    %cst_10 = arith.constant dense<0.000000e+00> : vector<8x128xf32>
    %16 = tpu.matmul %14, %15, %cst_10 {dimension_numbers = #tpu.dot_dimension_numbers<[1], [0], [0], [1], [0, 0, 1, 1], [], []>} : vector<8x256xbf16>, vector<256x128xbf16>, vector<8x128xf32> -> vector<8x128xf32>
    %c0_11 = arith.constant 0 : index
    %c0_12 = arith.constant 0 : index
    %17 = vector.load %arg5[%c0_11, %c0_12] : memref<1x128xf32, #tpu.memory_space<vmem>>, vector<1x128xf32>
    %18 = vector.broadcast %17 : vector<1x128xf32> to vector<8x128xf32>
    %19 = arith.addf %16, %18 : vector<8x128xf32>
    %cst_13 = arith.constant dense<0xFF800000> : vector<8xf32>
    %20 = vector.multi_reduction <maximumf>, %19, %cst_13 [1] : vector<8x128xf32> to vector<8xf32>
    %21 = vector.shape_cast %20 : vector<8xf32> to vector<8x1xf32>
    %22 = vector.broadcast %21 : vector<8x1xf32> to vector<8x128xf32>
    %23 = arith.subf %19, %22 : vector<8x128xf32>
    %24 = math.exp %23 : vector<8x128xf32>
    %cst_14 = arith.constant dense<0.000000e+00> : vector<8xf32>
    %25 = vector.multi_reduction <add>, %24, %cst_14 [1] : vector<8x128xf32> to vector<8xf32>
    %26 = vector.shape_cast %25 : vector<8xf32> to vector<8x1xf32>
    %27 = vector.broadcast %26 : vector<8x1xf32> to vector<8x128xf32>
    %28 = arith.divf %24, %27 : vector<8x128xf32>
    %c0_15 = arith.constant 0 : index
    %c0_16 = arith.constant 0 : index
    %29 = vector.load %arg6[%c0_15, %c0_16] : memref<8x128xf32, #tpu.memory_space<vmem>>, vector<8x128xf32>
    tpu.vector_store %arg6[%c0_15, %c0_16], %28 {strides = array<i32>} : memref<8x128xf32, #tpu.memory_space<vmem>>, vector<8x128xf32>,
    return
  }
  func.func @transform_0(%arg0: i32) -> (i32, i32) {
    %c0_i32 = arith.constant 0 : i32
    %c0_i32_0 = arith.constant 0 : i32
    return %arg0, %c0_i32 : i32, i32
  }
  func.func @transform_1(%arg0: i32) -> (i32, i32) {
    %c0_i32 = arith.constant 0 : i32
    %c0_i32_0 = arith.constant 0 : i32
    %c0_i32_1 = arith.constant 0 : i32
    return %c0_i32, %c0_i32_0 : i32, i32
  }
  func.func @transform_2(%arg0: i32) -> (i32, i32) {
    %c0_i32 = arith.constant 0 : i32
    %c0_i32_0 = arith.constant 0 : i32
    %c0_i32_1 = arith.constant 0 : i32
    return %c0_i32, %c0_i32_0 : i32, i32
  }
  func.func @transform_3(%arg0: i32) -> (i32, i32) {
    %c0_i32 = arith.constant 0 : i32
    %c0_i32_0 = arith.constant 0 : i32
    %c0_i32_1 = arith.constant 0 : i32
    return %c0_i32, %c0_i32_0 : i32, i32
  }
  func.func @transform_4(%arg0: i32) -> (i32, i32) {
    %c0_i32 = arith.constant 0 : i32
    %c0_i32_0 = arith.constant 0 : i32
    %c0_i32_1 = arith.constant 0 : i32
    return %c0_i32, %c0_i32_0 : i32, i32
  }
  func.func @transform_5(%arg0: i32) -> (i32, i32) {
    %c0_i32 = arith.constant 0 : i32
    %c0_i32_0 = arith.constant 0 : i32
    return %arg0, %c0_i32 : i32, i32
  }
}

</mosaic_0001>

<llo_original>
// kernel: tpu_custom_call.1
$region0: #{tpu_custom_call.1}
  #allocation0 [shape = 'u32[]', space=smem, size = 0x4, offset = 0x4, fixed_abs, tag = 'smem constant byte address 0x4 - core index']
  #allocation1 [shape = 'u32[72,128]{1,0:T(1,128)}', space=vmem, size = 0x9000, scoped, tag = 'internal scratch']
  %s0 = inlined_call_operand.hbm [shape: f32[8,1024], index: 0, kind: input, shape index: {}]
  %s1 = inlined_call_operand.hbm [shape: bf16[1024,256], index: 1, kind: input, shape index: {}]
  %s2 = inlined_call_operand.hbm [shape: f32[1,256], index: 2, kind: input, shape index: {}]
  %s3 = inlined_call_operand.hbm [shape: bf16[256,128], index: 3, kind: input, shape index: {}]
  %s4 = inlined_call_operand.vmem [shape: f32[1,128], index: 4, kind: input, shape index: {}]
  %s5 = inlined_call_operand.hbm [shape: f32[8,128], index: 5, kind: output, shape index: {}]
  %s6 = sld [smem:[#allocation0]]
  $region46: #{tpu_custom_call.1} parent=0
    _
  %s8 = ssub.s32 1, %s6
  %s9 = scalar_select 0, %s8, %s6
  $region1: #{tpu_custom_call.1} parent=0
    #allocation2 [shape = 'u8[32768]{0}', space=vmem, size = 0x8000, scoped, tag = 'input window, operand 0, single buffered']
    #allocation3 [shape = 's32[1]{0}', space=sflag, size = 0x4, scoped, tag = 'scoped memory for tpu_custom_call.1']
    #allocation4 [shape = 's32[1]{0}', space=sflag, size = 0x4, scoped, tag = 'scoped memory for tpu_custom_call.1']
    #allocation5 [shape = 'u8[524288]{0}', space=vmem, size = 0x80000, scoped, tag = 'input window, operand 1, single buffered']
    #allocation6 [shape = 's32[1]{0}', space=sflag, size = 0x4, scoped, tag = 'scoped memory for tpu_custom_call.1']
    #allocation7 [shape = 'u8[1024]{0}', space=vmem, size = 0x400, scoped, tag = 'input window, operand 2, single buffered']
    #allocation8 [shape = 'u8[65536]{0}', space=vmem, size = 0x10000, scoped, tag = 'input window, operand 3, single buffered']
    #allocation9 [shape = 's32[1]{0}', space=sflag, size = 0x4, scoped, tag = 'scoped memory for tpu_custom_call.1']
    #allocation10 [shape = 'u8[4096]{0}', space=vmem, size = 0x1000, scoped, tag = 'output window, operand 0, single buffered']
    %10 = vsyncpa [#allocation3], 0
    %11 = vsyncpa [#allocation6], 0
    %12 = vsyncpa [#allocation9], 0
    %13 = vsyncpa [#allocation4], 0
    // Predicated region
    $region2: #{tpu_custom_call.1} parent=1 // pred_check
      _
    $region3: #{tpu_custom_call.1} parent=1 // pred_check_branch
      %15 = sbr.rel (0) target = $region5
    $region4: #{tpu_custom_call.1} parent=1 // pred_region
      %17 = vsyncadd [#allocation3], 0
      %s19 = sshll.u32 %s0, 4
      %s20 = int_to_ptr.hbm [resolvable:$true] %s19
      %s21 = sshll.u32 [#allocation2], 4
      %s22 = int_to_ptr.vmem [resolvable:$true] %s21
      %24 = dma.hbm_to_vmem [thread:$0]  %s20, 1024, %s22, [#allocation3]
    $region5: #{tpu_custom_call.1} parent=1 // pred_fallthru
      _
    // Predicated region
    $region6: #{tpu_custom_call.1} parent=1 // pred_check
      _
    $region7: #{tpu_custom_call.1} parent=1 // pred_check_branch
      %26 = sbr.rel (0) target = $region9
    $region8: #{tpu_custom_call.1} parent=1 // pred_region
      %28 = vsyncadd [#allocation6], 0
      %s29 = sshll.u32 %s1, 4
      %s30 = int_to_ptr.hbm [resolvable:$true] %s29
      %s31 = sshll.u32 [#allocation5], 4
      %s32 = int_to_ptr.vmem [resolvable:$true] %s31
      %37 = dma.hbm_to_vmem [thread:$0]  %s30, 16384, %s32, [#allocation6], 128, 128, 8
    $region9: #{tpu_custom_call.1} parent=1 // pred_fallthru
      _
    // Predicated region
    $region10: #{tpu_custom_call.1} parent=1 // pred_check
      _
    $region11: #{tpu_custom_call.1} parent=1 // pred_check_branch
      %39 = sbr.rel (0) target = $region13
    $region12: #{tpu_custom_call.1} parent=1 // pred_region
      %41 = vsyncadd [#allocation6], 0
      %s43 = sshll.u32 %s2, 4
      %s44 = int_to_ptr.hbm [resolvable:$true] %s43
      %s45 = sshll.u32 [#allocation7], 4
      %s46 = int_to_ptr.vmem [resolvable:$true] %s45
      %48 = dma.hbm_to_vmem [thread:$0]  %s44, 32, %s46, [#allocation6]
    $region13: #{tpu_custom_call.1} parent=1 // pred_fallthru
      _
    // Predicated region
    $region14: #{tpu_custom_call.1} parent=1 // pred_check
      _
    $region15: #{tpu_custom_call.1} parent=1 // pred_check_branch
      %50 = sbr.rel (0) target = $region17
    $region16: #{tpu_custom_call.1} parent=1 // pred_region
      %52 = vsyncadd [#allocation9], 0
      %s53 = sshll.u32 %s3, 4
      %s54 = int_to_ptr.hbm [resolvable:$true] %s53
      %s55 = sshll.u32 [#allocation8], 4
      %s56 = int_to_ptr.vmem [resolvable:$true] %s55
      %61 = dma.hbm_to_vmem [thread:$0]  %s54, 2048, %s56, [#allocation9], 64, 64, 4
    $region17: #{tpu_custom_call.1} parent=1 // pred_fallthru
      _
    // Predicated region
    $region18: #{tpu_custom_call.1} parent=1 // pred_check
      _
    $region19: #{tpu_custom_call.1} parent=1 // pred_check_branch
      %63 = sbr.rel (0) target = $region21
    $region20: #{tpu_custom_call.1} parent=1 // pred_region
      _
    $region21: #{tpu_custom_call.1} parent=1 // pred_fallthru
      _
    // Predicated region
    $region22: #{tpu_custom_call.1} parent=1 // pred_check
      _
    $region23: #{tpu_custom_call.1} parent=1 // pred_check_branch
      %65 = sbr.rel (0) target = $region25
    $region24: #{tpu_custom_call.1} parent=1 // pred_region
      %67 = dma.done [#allocation3], 1024
    $region25: #{tpu_custom_call.1} parent=1 // pred_fallthru
      _
    // Predicated region
    $region26: #{tpu_custom_call.1} parent=1 // pred_check
      _
    $region27: #{tpu_custom_call.1} parent=1 // pred_check_branch
      %69 = sbr.rel (0) target = $region29
    $region28: #{tpu_custom_call.1} parent=1 // pred_region
      %71 = dma.done [#allocation6], 16384
    $region29: #{tpu_custom_call.1} parent=1 // pred_fallthru
      _
    // Predicated region
    $region30: #{tpu_custom_call.1} parent=1 // pred_check
      _
    $region31: #{tpu_custom_call.1} parent=1 // pred_check_branch
      %73 = sbr.rel (0) target = $region33
    $region32: #{tpu_custom_call.1} parent=1 // pred_region
      %75 = dma.done [#allocation6], 32
    $region33: #{tpu_custom_call.1} parent=1 // pred_fallthru
      _
    // Predicated region
    $region34: #{tpu_custom_call.1} parent=1 // pred_check
      _
    $region35: #{tpu_custom_call.1} parent=1 // pred_check_branch
      %77 = sbr.rel (0) target = $region37
    $region36: #{tpu_custom_call.1} parent=1 // pred_region
      %79 = dma.done [#allocation9], 2048
    $region37: #{tpu_custom_call.1} parent=1 // pred_fallthru
      _
    %v80 = vld [vmem:[#allocation2] sm:$0xff]
    %v81 = vld [vmem:[#allocation2 + $0x8] sm:$0xff]
    %v82 = vld [vmem:[#allocation2 + $0x10] sm:$0xff]
    %v83 = vld [vmem:[#allocation2 + $0x18] sm:$0xff]
    %v84 = vld [vmem:[#allocation2 + $0x20] sm:$0xff]
    %v85 = vld [vmem:[#allocation2 + $0x28] sm:$0xff]
    %v86 = vld [vmem:[#allocation2 + $0x30] sm:$0xff]
    %v87 = vld [vmem:[#allocation2 + $0x38] sm:$0xff]
    %v88 = vpack.c.bf16 %v80, %v80
    %v89 = vpack.c.bf16 %v81, %v81
    %v90 = vpack.c.bf16 %v82, %v82
    %v91 = vpack.c.bf16 %v83, %v83
    %v92 = vpack.c.bf16 %v84, %v84
    %v93 = vpack.c.bf16 %v85, %v85
    %v94 = vpack.c.bf16 %v86, %v86
    %v95 = vpack.c.bf16 %v87, %v87
    %v96 = vld [vmem:[#allocation5] sm:$0xff]
    %v97 = vld [vmem:[#allocation5 + $0x8] sm:$0xff]
    %v98 = vld [vmem:[#allocation5 + $0x10] sm:$0xff]
    %v99 = vld [vmem:[#allocation5 + $0x18] sm:$0xff]
    %v100 = vld [vmem:[#allocation5 + $0x20] sm:$0xff]
    %v101 = vld [vmem:[#allocation5 + $0x28] sm:$0xff]
    %v102 = vld [vmem:[#allocation5 + $0x30] sm:$0xff]
    %v103 = vld [vmem:[#allocation5 + $0x38] sm:$0xff]
    %v104 = vld [vmem:[#allocation5 + $0x40] sm:$0xff]
    %v105 = vld [vmem:[#allocation5 + $0x48] sm:$0xff]
    %v106 = vld [vmem:[#allocation5 + $0x50] sm:$0xff]
    %v107 = vld [vmem:[#allocation5 + $0x58] sm:$0xff]
    %v108 = vld [vmem:[#allocation5 + $0x60] sm:$0xff]
    %v109 = vld [vmem:[#allocation5 + $0x68] sm:$0xff]
    %v110 = vld [vmem:[#allocation5 + $0x70] sm:$0xff]
    %v111 = vld [vmem:[#allocation5 + $0x78] sm:$0xff]
    %v112 = vld [vmem:[#allocation5 + $0x80] sm:$0xff]
    %v113 = vld [vmem:[#allocation5 + $0x88] sm:$0xff]
    %v114 = vld [vmem:[#allocation5 + $0x90] sm:$0xff]
    %v115 = vld [vmem:[#allocation5 + $0x98] sm:$0xff]
    %v116 = vld [vmem:[#allocation5 + $0xa0] sm:$0xff]
    %v117 = vld [vmem:[#allocation5 + $0xa8] sm:$0xff]
    %v118 = vld [vmem:[#allocation5 + $0xb0] sm:$0xff]
    %v119 = vld [vmem:[#allocation5 + $0xb8] sm:$0xff]
    %v120 = vld [vmem:[#allocation5 + $0xc0] sm:$0xff]
    %v121 = vld [vmem:[#allocation5 + $0xc8] sm:$0xff]
    %v122 = vld [vmem:[#allocation5 + $0xd0] sm:$0xff]
    %v123 = vld [vmem:[#allocation5 + $0xd8] sm:$0xff]
    %v124 = vld [vmem:[#allocation5 + $0xe0] sm:$0xff]
    %v125 = vld [vmem:[#allocation5 + $0xe8] sm:$0xff]
    %v126 = vld [vmem:[#allocation5 + $0xf0] sm:$0xff]
    %v127 = vld [vmem:[#allocation5 + $0xf8] sm:$0xff]
    %v128 = vld [vmem:[#allocation5 + $0x100] sm:$0xff]
    %v129 = vld [vmem:[#allocation5 + $0x108] sm:$0xff]
    %v130 = vld [vmem:[#allocation5 + $0x110] sm:$0xff]
    %v131 = vld [vmem:[#allocation5 + $0x118] sm:$0xff]
    %v132 = vld [vmem:[#allocation5 + $0x120] sm:$0xff]
    %v133 = vld [vmem:[#allocation5 + $0x128] sm:$0xff]
    %v134 = vld [vmem:[#allocation5 + $0x130] sm:$0xff]
    %v135 = vld [vmem:[#allocation5 + $0x138] sm:$0xff]
    %v136 = vld [vmem:[#allocation5 + $0x140] sm:$0xff]
    %v137 = vld [vmem:[#allocation5 + $0x148] sm:$0xff]
    %v138 = vld [vmem:[#allocation5 + $0x150] sm:$0xff]
    %v139 = vld [vmem:[#allocation5 + $0x158] sm:$0xff]
    %v140 = vld [vmem:[#allocation5 + $0x160] sm:$0xff]
    %v141 = vld [vmem:[#allocation5 + $0x168] sm:$0xff]
    %v142 = vld [vmem:[#allocation5 + $0x170] sm:$0xff]
    %v143 = vld [vmem:[#allocation5 + $0x178] sm:$0xff]
    %v144 = vld [vmem:[#allocation5 + $0x180] sm:$0xff]
    %v145 = vld [vmem:[#allocation5 + $0x188] sm:$0xff]
    %v146 = vld [vmem:[#allocation5 + $0x190] sm:$0xff]
    %v147 = vld [vmem:[#allocation5 + $0x198] sm:$0xff]
    %v148 = vld [vmem:[#allocation5 + $0x1a0] sm:$0xff]
    %v149 = vld [vmem:[#allocation5 + $0x1a8] sm:$0xff]
    %v150 = vld [vmem:[#allocation5 + $0x1b0] sm:$0xff]
    %v151 = vld [vmem:[#allocation5 + $0x1b8] sm:$0xff]
    %v152 = vld [vmem:[#allocation5 + $0x1c0] sm:$0xff]
    %v153 = vld [vmem:[#allocation5 + $0x1c8] sm:$0xff]
    %v154 = vld [vmem:[#allocation5 + $0x1d0] sm:$0xff]
    %v155 = vld [vmem:[#allocation5 + $0x1d8] sm:$0xff]
    %v156 = vld [vmem:[#allocation5 + $0x1e0] sm:$0xff]
    %v157 = vld [vmem:[#allocation5 + $0x1e8] sm:$0xff]
    %v158 = vld [vmem:[#allocation5 + $0x1f0] sm:$0xff]
    %v159 = vld [vmem:[#allocation5 + $0x1f8] sm:$0xff]
    %v160 = vld [vmem:[#allocation5 + $0x200] sm:$0xff]
    %v161 = vld [vmem:[#allocation5 + $0x208] sm:$0xff]
    %v162 = vld [vmem:[#allocation5 + $0x210] sm:$0xff]
    %v163 = vld [vmem:[#allocation5 + $0x218] sm:$0xff]
    %v164 = vld [vmem:[#allocation5 + $0x220] sm:$0xff]
    %v165 = vld [vmem:[#allocation5 + $0x228] sm:$0xff]
    %v166 = vld [vmem:[#allocation5 + $0x230] sm:$0xff]
    %v167 = vld [vmem:[#allocation5 + $0x238] sm:$0xff]
    %v168 = vld [vmem:[#allocation5 + $0x240] sm:$0xff]
    %v169 = vld [vmem:[#allocation5 + $0x248] sm:$0xff]
    %v170 = vld [vmem:[#allocation5 + $0x250] sm:$0xff]
    %v171 = vld [vmem:[#allocation5 + $0x258] sm:$0xff]
    %v172 = vld [vmem:[#allocation5 + $0x260] sm:$0xff]
    %v173 = vld [vmem:[#allocation5 + $0x268] sm:$0xff]
    %v174 = vld [vmem:[#allocation5 + $0x270] sm:$0xff]
    %v175 = vld [vmem:[#allocation5 + $0x278] sm:$0xff]
    %v176 = vld [vmem:[#allocation5 + $0x280] sm:$0xff]
    %v177 = vld [vmem:[#allocation5 + $0x288] sm:$0xff]
    %v178 = vld [vmem:[#allocation5 + $0x290] sm:$0xff]
    %v179 = vld [vmem:[#allocation5 + $0x298] sm:$0xff]
    %v180 = vld [vmem:[#allocation5 + $0x2a0] sm:$0xff]
    %v181 = vld [vmem:[#allocation5 + $0x2a8] sm:$0xff]
    %v182 = vld [vmem:[#allocation5 + $0x2b0] sm:$0xff]
    %v183 = vld [vmem:[#allocation5 + $0x2b8] sm:$0xff]
    %v184 = vld [vmem:[#allocation5 + $0x2c0] sm:$0xff]
    %v185 = vld [vmem:[#allocation5 + $0x2c8] sm:$0xff]
    %v186 = vld [vmem:[#allocation5 + $0x2d0] sm:$0xff]
    %v187 = vld [vmem:[#allocation5 + $0x2d8] sm:$0xff]
    %v188 = vld [vmem:[#allocation5 + $0x2e0] sm:$0xff]
    %v189 = vld [vmem:[#allocation5 + $0x2e8] sm:$0xff]
    %v190 = vld [vmem:[#allocation5 + $0x2f0] sm:$0xff]
    %v191 = vld [vmem:[#allocation5 + $0x2f8] sm:$0xff]
    %v192 = vld [vmem:[#allocation5 + $0x300] sm:$0xff]
    %v193 = vld [vmem:[#allocation5 + $0x308] sm:$0xff]
    %v194 = vld [vmem:[#allocation5 + $0x310] sm:$0xff]
    %v195 = vld [vmem:[#allocation5 + $0x318] sm:$0xff]
    %v196 = vld [vmem:[#allocation5 + $0x320] sm:$0xff]
    %v197 = vld [vmem:[#allocation5 + $0x328] sm:$0xff]
    %v198 = vld [vmem:[#allocation5 + $0x330] sm:$0xff]
    %v199 = vld [vmem:[#allocation5 + $0x338] sm:$0xff]
    %v200 = vld [vmem:[#allocation5 + $0x340] sm:$0xff]
    %v201 = vld [vmem:[#allocation5 + $0x348] sm:$0xff]
    %v202 = vld [vmem:[#allocation5 + $0x350] sm:$0xff]
    %v203 = vld [vmem:[#allocation5 + $0x358] sm:$0xff]
    %v204 = vld [vmem:[#allocation5 + $0x360] sm:$0xff]
    %v205 = vld [vmem:[#allocation5 + $0x368] sm:$0xff]
    %v206 = vld [vmem:[#allocation5 + $0x370] sm:$0xff]
    %v207 = vld [vmem:[#allocation5 + $0x378] sm:$0xff]
    %v208 = vld [vmem:[#allocation5 + $0x380] sm:$0xff]
    %v209 = vld [vmem:[#allocation5 + $0x388] sm:$0xff]
    %v210 = vld [vmem:[#allocation5 + $0x390] sm:$0xff]
    %v211 = vld [vmem:[#allocation5 + $0x398] sm:$0xff]
    %v212 = vld [vmem:[#allocation5 + $0x3a0] sm:$0xff]
    %v213 = vld [vmem:[#allocation5 + $0x3a8] sm:$0xff]
    %v214 = vld [vmem:[#allocation5 + $0x3b0] sm:$0xff]
    %v215 = vld [vmem:[#allocation5 + $0x3b8] sm:$0xff]
    %v216 = vld [vmem:[#allocation5 + $0x3c0] sm:$0xff]
    %v217 = vld [vmem:[#allocation5 + $0x3c8] sm:$0xff]
    %v218 = vld [vmem:[#allocation5 + $0x3d0] sm:$0xff]
    %v219 = vld [vmem:[#allocation5 + $0x3d8] sm:$0xff]
    %v220 = vld [vmem:[#allocation5 + $0x3e0] sm:$0xff]
    %v221 = vld [vmem:[#allocation5 + $0x3e8] sm:$0xff]
    %v222 = vld [vmem:[#allocation5 + $0x3f0] sm:$0xff]
    %v223 = vld [vmem:[#allocation5 + $0x3f8] sm:$0xff]
    %v224 = vld [vmem:[#allocation7] sm:$0x3]
    %v226 = vperm.slane %v224, 0
    %v227 = vperm.slane %v224, 1
    %v358 = vunpack.c.l.b16 %v96
    %v359 = vunpack.c.h.b16 %v96
    %v360 = vunpack.c.l.b16 %v97
    %v361 = vunpack.c.h.b16 %v97
    %v362 = vunpack.c.l.b16 %v98
    %v363 = vunpack.c.h.b16 %v98
    %v364 = vunpack.c.l.b16 %v99
    %v365 = vunpack.c.h.b16 %v99
    %v366 = vunpack.c.l.b16 %v100
    %v367 = vunpack.c.h.b16 %v100
    %v368 = vunpack.c.l.b16 %v101
    %v369 = vunpack.c.h.b16 %v101
    %v370 = vunpack.c.l.b16 %v102
    %v371 = vunpack.c.h.b16 %v102
    %v372 = vunpack.c.l.b16 %v103
    %v373 = vunpack.c.h.b16 %v103
    %v374 = vunpack.c.l.b16 %v104
    %v375 = vunpack.c.h.b16 %v104
    %v376 = vunpack.c.l.b16 %v105
    %v377 = vunpack.c.h.b16 %v105
    %v378 = vunpack.c.l.b16 %v106
    %v379 = vunpack.c.h.b16 %v106
    %v380 = vunpack.c.l.b16 %v107
    %v381 = vunpack.c.h.b16 %v107
    %v382 = vunpack.c.l.b16 %v108
    %v383 = vunpack.c.h.b16 %v108
    %v384 = vunpack.c.l.b16 %v109
    %v385 = vunpack.c.h.b16 %v109
    %v386 = vunpack.c.l.b16 %v110
    %v387 = vunpack.c.h.b16 %v110
    %v388 = vunpack.c.l.b16 %v111
    %v389 = vunpack.c.h.b16 %v111
    %v390 = vunpack.c.l.b16 %v112
    %v391 = vunpack.c.h.b16 %v112
    %v392 = vunpack.c.l.b16 %v113
    %v393 = vunpack.c.h.b16 %v113
    %v394 = vunpack.c.l.b16 %v114
    %v395 = vunpack.c.h.b16 %v114
    %v396 = vunpack.c.l.b16 %v115
    %v397 = vunpack.c.h.b16 %v115
    %v398 = vunpack.c.l.b16 %v116
    %v399 = vunpack.c.h.b16 %v116
    %v400 = vunpack.c.l.b16 %v117
    %v401 = vunpack.c.h.b16 %v117
    %v402 = vunpack.c.l.b16 %v118
    %v403 = vunpack.c.h.b16 %v118
    %v404 = vunpack.c.l.b16 %v119
    %v405 = vunpack.c.h.b16 %v119
    %v406 = vunpack.c.l.b16 %v120
    %v407 = vunpack.c.h.b16 %v120
    %v408 = vunpack.c.l.b16 %v121
    %v409 = vunpack.c.h.b16 %v121
    %v410 = vunpack.c.l.b16 %v122
    %v411 = vunpack.c.h.b16 %v122
    %v412 = vunpack.c.l.b16 %v123
    %v413 = vunpack.c.h.b16 %v123
    %v414 = vunpack.c.l.b16 %v124
    %v415 = vunpack.c.h.b16 %v124
    %v416 = vunpack.c.l.b16 %v125
    %v417 = vunpack.c.h.b16 %v125
    %v418 = vunpack.c.l.b16 %v126
    %v419 = vunpack.c.h.b16 %v126
    %v420 = vunpack.c.l.b16 %v127
    %v421 = vunpack.c.h.b16 %v127
    %v422 = vunpack.c.l.b16 %v128
    %v423 = vunpack.c.h.b16 %v128
    %v424 = vunpack.c.l.b16 %v129
    %v425 = vunpack.c.h.b16 %v129
    %v426 = vunpack.c.l.b16 %v130
    %v427 = vunpack.c.h.b16 %v130
    %v428 = vunpack.c.l.b16 %v131
    %v429 = vunpack.c.h.b16 %v131
    %v430 = vunpack.c.l.b16 %v132
    %v431 = vunpack.c.h.b16 %v132
    %v432 = vunpack.c.l.b16 %v133
    %v433 = vunpack.c.h.b16 %v133
    %v434 = vunpack.c.l.b16 %v134
    %v435 = vunpack.c.h.b16 %v134
    %v436 = vunpack.c.l.b16 %v135
    %v437 = vunpack.c.h.b16 %v135
    %v438 = vunpack.c.l.b16 %v136
    %v439 = vunpack.c.h.b16 %v136
    %v440 = vunpack.c.l.b16 %v137
    %v441 = vunpack.c.h.b16 %v137
    %v442 = vunpack.c.l.b16 %v138
    %v443 = vunpack.c.h.b16 %v138
    %v444 = vunpack.c.l.b16 %v139
    %v445 = vunpack.c.h.b16 %v139
    %v446 = vunpack.c.l.b16 %v140
    %v447 = vunpack.c.h.b16 %v140
    %v448 = vunpack.c.l.b16 %v141
    %v449 = vunpack.c.h.b16 %v141
    %v450 = vunpack.c.l.b16 %v142
    %v451 = vunpack.c.h.b16 %v142
    %v452 = vunpack.c.l.b16 %v143
    %v453 = vunpack.c.h.b16 %v143
    %v454 = vunpack.c.l.b16 %v144
    %v455 = vunpack.c.h.b16 %v144
    %v456 = vunpack.c.l.b16 %v145
    %v457 = vunpack.c.h.b16 %v145
    %v458 = vunpack.c.l.b16 %v146
    %v459 = vunpack.c.h.b16 %v146
    %v460 = vunpack.c.l.b16 %v147
    %v461 = vunpack.c.h.b16 %v147
    %v462 = vunpack.c.l.b16 %v148
    %v463 = vunpack.c.h.b16 %v148
    %v464 = vunpack.c.l.b16 %v149
    %v465 = vunpack.c.h.b16 %v149
    %v466 = vunpack.c.l.b16 %v150
    %v467 = vunpack.c.h.b16 %v150
    %v468 = vunpack.c.l.b16 %v151
    %v469 = vunpack.c.h.b16 %v151
    %v470 = vunpack.c.l.b16 %v152
    %v471 = vunpack.c.h.b16 %v152
    %v472 = vunpack.c.l.b16 %v153
    %v473 = vunpack.c.h.b16 %v153
    %v474 = vunpack.c.l.b16 %v154
    %v475 = vunpack.c.h.b16 %v154
    %v476 = vunpack.c.l.b16 %v155
    %v477 = vunpack.c.h.b16 %v155
    %v478 = vunpack.c.l.b16 %v156
    %v479 = vunpack.c.h.b16 %v156
    %v480 = vunpack.c.l.b16 %v157
    %v481 = vunpack.c.h.b16 %v157
    %v482 = vunpack.c.l.b16 %v158
    %v483 = vunpack.c.h.b16 %v158
    %v484 = vunpack.c.l.b16 %v159
    %v485 = vunpack.c.h.b16 %v159
    %v486 = vunpack.c.l.b16 %v160
    %v487 = vunpack.c.h.b16 %v160
    %v488 = vunpack.c.l.b16 %v161
    %v489 = vunpack.c.h.b16 %v161
    %v490 = vunpack.c.l.b16 %v162
    %v491 = vunpack.c.h.b16 %v162
    %v492 = vunpack.c.l.b16 %v163
    %v493 = vunpack.c.h.b16 %v163
    %v494 = vunpack.c.l.b16 %v164
    %v495 = vunpack.c.h.b16 %v164
    %v496 = vunpack.c.l.b16 %v165
    %v497 = vunpack.c.h.b16 %v165
    %v498 = vunpack.c.l.b16 %v166
    %v499 = vunpack.c.h.b16 %v166
    %v500 = vunpack.c.l.b16 %v167
    %v501 = vunpack.c.h.b16 %v167
    %v502 = vunpack.c.l.b16 %v168
    %v503 = vunpack.c.h.b16 %v168
    %v504 = vunpack.c.l.b16 %v169
    %v505 = vunpack.c.h.b16 %v169
    %v506 = vunpack.c.l.b16 %v170
    %v507 = vunpack.c.h.b16 %v170
    %v508 = vunpack.c.l.b16 %v171
    %v509 = vunpack.c.h.b16 %v171
    %v510 = vunpack.c.l.b16 %v172
    %v511 = vunpack.c.h.b16 %v172
    %v512 = vunpack.c.l.b16 %v173
    %v513 = vunpack.c.h.b16 %v173
    %v514 = vunpack.c.l.b16 %v174
    %v515 = vunpack.c.h.b16 %v174
    %v516 = vunpack.c.l.b16 %v175
    %v517 = vunpack.c.h.b16 %v175
    %v518 = vunpack.c.l.b16 %v176
    %v519 = vunpack.c.h.b16 %v176
    %v520 = vunpack.c.l.b16 %v177
    %v521 = vunpack.c.h.b16 %v177
    %v522 = vunpack.c.l.b16 %v178
    %v523 = vunpack.c.h.b16 %v178
    %v524 = vunpack.c.l.b16 %v179
    %v525 = vunpack.c.h.b16 %v179
    %v526 = vunpack.c.l.b16 %v180
    %v527 = vunpack.c.h.b16 %v180
    %v528 = vunpack.c.l.b16 %v181
    %v529 = vunpack.c.h.b16 %v181
    %v530 = vunpack.c.l.b16 %v182
    %v531 = vunpack.c.h.b16 %v182
    %v532 = vunpack.c.l.b16 %v183
    %v533 = vunpack.c.h.b16 %v183
    %v534 = vunpack.c.l.b16 %v184
    %v535 = vunpack.c.h.b16 %v184
    %v536 = vunpack.c.l.b16 %v185
    %v537 = vunpack.c.h.b16 %v185
    %v538 = vunpack.c.l.b16 %v186
    %v539 = vunpack.c.h.b16 %v186
    %v540 = vunpack.c.l.b16 %v187
    %v541 = vunpack.c.h.b16 %v187
    %v542 = vunpack.c.l.b16 %v188
    %v543 = vunpack.c.h.b16 %v188
    %v544 = vunpack.c.l.b16 %v189
    %v545 = vunpack.c.h.b16 %v189
    %v546 = vunpack.c.l.b16 %v190
    %v547 = vunpack.c.h.b16 %v190
    %v548 = vunpack.c.l.b16 %v191
    %v549 = vunpack.c.h.b16 %v191
    %v550 = vunpack.c.l.b16 %v192
    %v551 = vunpack.c.h.b16 %v192
    %v552 = vunpack.c.l.b16 %v193
    %v553 = vunpack.c.h.b16 %v193
    %v554 = vunpack.c.l.b16 %v194
    %v555 = vunpack.c.h.b16 %v194
    %v556 = vunpack.c.l.b16 %v195
    %v557 = vunpack.c.h.b16 %v195
    %v558 = vunpack.c.l.b16 %v196
    %v559 = vunpack.c.h.b16 %v196
    %v560 = vunpack.c.l.b16 %v197
    %v561 = vunpack.c.h.b16 %v197
    %v562 = vunpack.c.l.b16 %v198
    %v563 = vunpack.c.h.b16 %v198
    %v564 = vunpack.c.l.b16 %v199
    %v565 = vunpack.c.h.b16 %v199
    %v566 = vunpack.c.l.b16 %v200
    %v567 = vunpack.c.h.b16 %v200
    %v568 = vunpack.c.l.b16 %v201
    %v569 = vunpack.c.h.b16 %v201
    %v570 = vunpack.c.l.b16 %v202
    %v571 = vunpack.c.h.b16 %v202
    %v572 = vunpack.c.l.b16 %v203
    %v573 = vunpack.c.h.b16 %v203
    %v574 = vunpack.c.l.b16 %v204
    %v575 = vunpack.c.h.b16 %v204
    %v576 = vunpack.c.l.b16 %v205
    %v577 = vunpack.c.h.b16 %v205
    %v578 = vunpack.c.l.b16 %v206
    %v579 = vunpack.c.h.b16 %v206
    %v580 = vunpack.c.l.b16 %v207
    %v581 = vunpack.c.h.b16 %v207
    %v582 = vunpack.c.l.b16 %v208
    %v583 = vunpack.c.h.b16 %v208
    %v584 = vunpack.c.l.b16 %v209
    %v585 = vunpack.c.h.b16 %v209
    %v586 = vunpack.c.l.b16 %v210
    %v587 = vunpack.c.h.b16 %v210
    %v588 = vunpack.c.l.b16 %v211
    %v589 = vunpack.c.h.b16 %v211
    %v590 = vunpack.c.l.b16 %v212
    %v591 = vunpack.c.h.b16 %v212
    %v592 = vunpack.c.l.b16 %v213
    %v593 = vunpack.c.h.b16 %v213
    %v594 = vunpack.c.l.b16 %v214
    %v595 = vunpack.c.h.b16 %v214
    %v596 = vunpack.c.l.b16 %v215
    %v597 = vunpack.c.h.b16 %v215
    %v598 = vunpack.c.l.b16 %v216
    %v599 = vunpack.c.h.b16 %v216
    %v600 = vunpack.c.l.b16 %v217
    %v601 = vunpack.c.h.b16 %v217
    %v602 = vunpack.c.l.b16 %v218
    %v603 = vunpack.c.h.b16 %v218
    %v604 = vunpack.c.l.b16 %v219
    %v605 = vunpack.c.h.b16 %v219
    %v606 = vunpack.c.l.b16 %v220
    %v607 = vunpack.c.h.b16 %v220
    %v608 = vunpack.c.l.b16 %v221
    %v609 = vunpack.c.h.b16 %v221
    %v610 = vunpack.c.l.b16 %v222
    %v611 = vunpack.c.h.b16 %v222
    %v612 = vunpack.c.l.b16 %v223
    %v613 = vunpack.c.h.b16 %v223
    %v614 = vpack.c.b16 %v360, %v358
    %v615 = vpack.c.b16 %v361, %v359
    %v616 = vpack.c.b16 %v364, %v362
    %v617 = vpack.c.b16 %v365, %v363
    %v618 = vpack.c.b16 %v368, %v366
    %v619 = vpack.c.b16 %v369, %v367
    %v620 = vpack.c.b16 %v372, %v370
    %v621 = vpack.c.b16 %v373, %v371
    %v622 = vpack.c.b16 %v376, %v374
    %v623 = vpack.c.b16 %v377, %v375
    %v624 = vpack.c.b16 %v380, %v378
    %v625 = vpack.c.b16 %v381, %v379
    %v626 = vpack.c.b16 %v384, %v382
    %v627 = vpack.c.b16 %v385, %v383
    %v628 = vpack.c.b16 %v388, %v386
    %v629 = vpack.c.b16 %v389, %v387
    %v630 = vpack.c.b16 %v392, %v390
    %v631 = vpack.c.b16 %v393, %v391
    %v632 = vpack.c.b16 %v396, %v394
    %v633 = vpack.c.b16 %v397, %v395
    %v634 = vpack.c.b16 %v400, %v398
    %v635 = vpack.c.b16 %v401, %v399
    %v636 = vpack.c.b16 %v404, %v402
    %v637 = vpack.c.b16 %v405, %v403
    %v638 = vpack.c.b16 %v408, %v406
    %v639 = vpack.c.b16 %v409, %v407
    %v640 = vpack.c.b16 %v412, %v410
    %v641 = vpack.c.b16 %v413, %v411
    %v642 = vpack.c.b16 %v416, %v414
    %v643 = vpack.c.b16 %v417, %v415
    %v644 = vpack.c.b16 %v420, %v418
    %v645 = vpack.c.b16 %v421, %v419
    %v646 = vpack.c.b16 %v424, %v422
    %v647 = vpack.c.b16 %v425, %v423
    %v648 = vpack.c.b16 %v428, %v426
    %v649 = vpack.c.b16 %v429, %v427
    %v650 = vpack.c.b16 %v432, %v430
    %v651 = vpack.c.b16 %v433, %v431
    %v652 = vpack.c.b16 %v436, %v434
    %v653 = vpack.c.b16 %v437, %v435
    %v654 = vpack.c.b16 %v440, %v438
    %v655 = vpack.c.b16 %v441, %v439
    %v656 = vpack.c.b16 %v444, %v442
    %v657 = vpack.c.b16 %v445, %v443
    %v658 = vpack.c.b16 %v448, %v446
    %v659 = vpack.c.b16 %v449, %v447
    %v660 = vpack.c.b16 %v452, %v450
    %v661 = vpack.c.b16 %v453, %v451
    %v662 = vpack.c.b16 %v456, %v454
    %v663 = vpack.c.b16 %v457, %v455
    %v664 = vpack.c.b16 %v460, %v458
    %v665 = vpack.c.b16 %v461, %v459
    %v666 = vpack.c.b16 %v464, %v462
    %v667 = vpack.c.b16 %v465, %v463
    %v668 = vpack.c.b16 %v468, %v466
    %v669 = vpack.c.b16 %v469, %v467
    %v670 = vpack.c.b16 %v472, %v470
    %v671 = vpack.c.b16 %v473, %v471
    %v672 = vpack.c.b16 %v476, %v474
    %v673 = vpack.c.b16 %v477, %v475
    %v674 = vpack.c.b16 %v480, %v478
    %v675 = vpack.c.b16 %v481, %v479
    %v676 = vpack.c.b16 %v484, %v482
    %v677 = vpack.c.b16 %v485, %v483
    %v678 = vpack.c.b16 %v488, %v486
    %v679 = vpack.c.b16 %v489, %v487
    %v680 = vpack.c.b16 %v492, %v490
    %v681 = vpack.c.b16 %v493, %v491
    %v682 = vpack.c.b16 %v496, %v494
    %v683 = vpack.c.b16 %v497, %v495
    %v684 = vpack.c.b16 %v500, %v498
    %v685 = vpack.c.b16 %v501, %v499
    %v686 = vpack.c.b16 %v504, %v502
    %v687 = vpack.c.b16 %v505, %v503
    %v688 = vpack.c.b16 %v508, %v506
    %v689 = vpack.c.b16 %v509, %v507
    %v690 = vpack.c.b16 %v512, %v510
    %v691 = vpack.c.b16 %v513, %v511
    %v692 = vpack.c.b16 %v516, %v514
    %v693 = vpack.c.b16 %v517, %v515
    %v694 = vpack.c.b16 %v520, %v518
    %v695 = vpack.c.b16 %v521, %v519
    %v696 = vpack.c.b16 %v524, %v522
    %v697 = vpack.c.b16 %v525, %v523
    %v698 = vpack.c.b16 %v528, %v526
    %v699 = vpack.c.b16 %v529, %v527
    %v700 = vpack.c.b16 %v532, %v530
    %v701 = vpack.c.b16 %v533, %v531
    %v702 = vpack.c.b16 %v536, %v534
    %v703 = vpack.c.b16 %v537, %v535
    %v704 = vpack.c.b16 %v540, %v538
    %v705 = vpack.c.b16 %v541, %v539
    %v706 = vpack.c.b16 %v544, %v542
    %v707 = vpack.c.b16 %v545, %v543
    %v708 = vpack.c.b16 %v548, %v546
    %v709 = vpack.c.b16 %v549, %v547
    %v710 = vpack.c.b16 %v552, %v550
    %v711 = vpack.c.b16 %v553, %v551
    %v712 = vpack.c.b16 %v556, %v554
    %v713 = vpack.c.b16 %v557, %v555
    %v714 = vpack.c.b16 %v560, %v558
    %v715 = vpack.c.b16 %v561, %v559
    %v716 = vpack.c.b16 %v564, %v562
    %v717 = vpack.c.b16 %v565, %v563
    %v718 = vpack.c.b16 %v568, %v566
    %v719 = vpack.c.b16 %v569, %v567
    %v720 = vpack.c.b16 %v572, %v570
    %v721 = vpack.c.b16 %v573, %v571
    %v722 = vpack.c.b16 %v576, %v574
    %v723 = vpack.c.b16 %v577, %v575
    %v724 = vpack.c.b16 %v580, %v578
    %v725 = vpack.c.b16 %v581, %v579
    %v726 = vpack.c.b16 %v584, %v582
    %v727 = vpack.c.b16 %v585, %v583
    %v728 = vpack.c.b16 %v588, %v586
    %v729 = vpack.c.b16 %v589, %v587
    %v730 = vpack.c.b16 %v592, %v590
    %v731 = vpack.c.b16 %v593, %v591
    %v732 = vpack.c.b16 %v596, %v594
    %v733 = vpack.c.b16 %v597, %v595
    %v734 = vpack.c.b16 %v600, %v598
    %v735 = vpack.c.b16 %v601, %v599
    %v736 = vpack.c.b16 %v604, %v602
    %v737 = vpack.c.b16 %v605, %v603
    %v738 = vpack.c.b16 %v608, %v606
    %v739 = vpack.c.b16 %v609, %v607
    %v740 = vpack.c.b16 %v612, %v610
    %v741 = vpack.c.b16 %v613, %v611
    %870 = vmatpush.bf16.msra.mxu0 %v628
    %871 = vmatpush.bf16.msra.mxu0 %v626
    %872 = vmatpush.bf16.msra.mxu0 %v624
    %873 = vmatpush.bf16.msra.mxu0 %v622
    %874 = vmatpush.bf16.msra.mxu0 %v620
    %875 = vmatpush.bf16.msra.mxu0 %v618
    %876 = vmatpush.bf16.msra.mxu0 %v616
    %877 = vmatpush.bf16.msra.mxu0 %v614
    %878 = vmatmul.bf16.gmra.mxu0 %v88
    %v879 = vpop.f32.mrf.mxu0
    %v880 = vadd.f32 %v226, %v879
    %v881 = vpop.f32.mrf.mxu0
    %882 = vdwg.mxu0
    %883 = vmatpush.bf16.msra.mxu0 %v644
    %884 = vmatpush.bf16.msra.mxu0 %v642
    %885 = vmatpush.bf16.msra.mxu0 %v640
    %886 = vmatpush.bf16.msra.mxu0 %v638
    %887 = vmatpush.bf16.msra.mxu0 %v636
    %888 = vmatpush.bf16.msra.mxu0 %v634
    %889 = vmatpush.bf16.msra.mxu0 %v632
    %890 = vmatpush.bf16.msra.mxu0 %v630
    %891 = vmatmul.bf16.gmra.mxu0 %v89
    %v892 = vpop.f32.mrf.mxu0
    %v893 = vadd.f32 %v880, %v892
    %v894 = vpop.f32.mrf.mxu0
    %895 = vdwg.mxu0
    %896 = vmatpush.bf16.msra.mxu0 %v660
    %897 = vmatpush.bf16.msra.mxu0 %v658
    %898 = vmatpush.bf16.msra.mxu0 %v656
    %899 = vmatpush.bf16.msra.mxu0 %v654
    %900 = vmatpush.bf16.msra.mxu0 %v652
    %901 = vmatpush.bf16.msra.mxu0 %v650
    %902 = vmatpush.bf16.msra.mxu0 %v648
    %903 = vmatpush.bf16.msra.mxu0 %v646
    %904 = vmatmul.bf16.gmra.mxu0 %v90
    %v905 = vpop.f32.mrf.mxu0
    %v906 = vadd.f32 %v893, %v905
    %v907 = vpop.f32.mrf.mxu0
    %908 = vdwg.mxu0
    %909 = vmatpush.bf16.msra.mxu0 %v676
    %910 = vmatpush.bf16.msra.mxu0 %v674
    %911 = vmatpush.bf16.msra.mxu0 %v672
    %912 = vmatpush.bf16.msra.mxu0 %v670
    %913 = vmatpush.bf16.msra.mxu0 %v668
    %914 = vmatpush.bf16.msra.mxu0 %v666
    %915 = vmatpush.bf16.msra.mxu0 %v664
    %916 = vmatpush.bf16.msra.mxu0 %v662
    %917 = vmatmul.bf16.gmra.mxu0 %v91
    %v918 = vpop.f32.mrf.mxu0
    %v919 = vadd.f32 %v906, %v918
    %v920 = vpop.f32.mrf.mxu0
    %921 = vdwg.mxu0
    %922 = vmatpush.bf16.msra.mxu0 %v692
    %923 = vmatpush.bf16.msra.mxu0 %v690
    %924 = vmatpush.bf16.msra.mxu0 %v688
    %925 = vmatpush.bf16.msra.mxu0 %v686
    %926 = vmatpush.bf16.msra.mxu0 %v684
    %927 = vmatpush.bf16.msra.mxu0 %v682
    %928 = vmatpush.bf16.msra.mxu0 %v680
    %929 = vmatpush.bf16.msra.mxu0 %v678
    %930 = vmatmul.bf16.gmra.mxu0 %v92
    %v931 = vpop.f32.mrf.mxu0
    %v932 = vadd.f32 %v919, %v931
    %v933 = vpop.f32.mrf.mxu0
    %934 = vdwg.mxu0
    %935 = vmatpush.bf16.msra.mxu0 %v708
    %936 = vmatpush.bf16.msra.mxu0 %v706
    %937 = vmatpush.bf16.msra.mxu0 %v704
    %938 = vmatpush.bf16.msra.mxu0 %v702
    %939 = vmatpush.bf16.msra.mxu0 %v700
    %940 = vmatpush.bf16.msra.mxu0 %v698
    %941 = vmatpush.bf16.msra.mxu0 %v696
    %942 = vmatpush.bf16.msra.mxu0 %v694
    %943 = vmatmul.bf16.gmra.mxu0 %v93
    %v944 = vpop.f32.mrf.mxu0
    %v945 = vadd.f32 %v932, %v944
    %v946 = vpop.f32.mrf.mxu0
    %947 = vdwg.mxu0
    %948 = vmatpush.bf16.msra.mxu0 %v724
    %949 = vmatpush.bf16.msra.mxu0 %v722
    %950 = vmatpush.bf16.msra.mxu0 %v720
    %951 = vmatpush.bf16.msra.mxu0 %v718
    %952 = vmatpush.bf16.msra.mxu0 %v716
    %953 = vmatpush.bf16.msra.mxu0 %v714
    %954 = vmatpush.bf16.msra.mxu0 %v712
    %955 = vmatpush.bf16.msra.mxu0 %v710
    %956 = vmatmul.bf16.gmra.mxu0 %v94
    %v957 = vpop.f32.mrf.mxu0
    %v958 = vadd.f32 %v945, %v957
    %v959 = vpop.f32.mrf.mxu0
    %960 = vdwg.mxu0
    %961 = vmatpush.bf16.msra.mxu0 %v740
    %962 = vmatpush.bf16.msra.mxu0 %v738
    %963 = vmatpush.bf16.msra.mxu0 %v736
    %964 = vmatpush.bf16.msra.mxu0 %v734
    %965 = vmatpush.bf16.msra.mxu0 %v732
    %966 = vmatpush.bf16.msra.mxu0 %v730
    %967 = vmatpush.bf16.msra.mxu0 %v728
    %968 = vmatpush.bf16.msra.mxu0 %v726
    %969 = vmatmul.bf16.gmra.mxu0 %v95
    %v970 = vpop.f32.mrf.mxu0
    %v971 = vadd.f32 %v958, %v970
    %v972 = vpop.f32.mrf.mxu0
    %973 = vdwg.mxu0
    %974 = vmatpush.bf16.msra.mxu0 %v629
    %975 = vmatpush.bf16.msra.mxu0 %v627
    %976 = vmatpush.bf16.msra.mxu0 %v625
    %977 = vmatpush.bf16.msra.mxu0 %v623
    %978 = vmatpush.bf16.msra.mxu0 %v621
    %979 = vmatpush.bf16.msra.mxu0 %v619
    %980 = vmatpush.bf16.msra.mxu0 %v617
    %981 = vmatpush.bf16.msra.mxu0 %v615
    %982 = vmatmul.bf16.gmra.mxu0 %v88
    %v983 = vpop.f32.mrf.mxu0
    %v984 = vadd.f32 %v227, %v983
    %v985 = vpop.f32.mrf.mxu0
    %986 = vdwg.mxu0
    %987 = vmatpush.bf16.msra.mxu0 %v645
    %988 = vmatpush.bf16.msra.mxu0 %v643
    %989 = vmatpush.bf16.msra.mxu0 %v641
    %990 = vmatpush.bf16.msra.mxu0 %v639
    %991 = vmatpush.bf16.msra.mxu0 %v637
    %992 = vmatpush.bf16.msra.mxu0 %v635
    %993 = vmatpush.bf16.msra.mxu0 %v633
    %994 = vmatpush.bf16.msra.mxu0 %v631
    %995 = vmatmul.bf16.gmra.mxu0 %v89
    %v996 = vpop.f32.mrf.mxu0
    %v997 = vadd.f32 %v984, %v996
    %v998 = vpop.f32.mrf.mxu0
    %999 = vdwg.mxu0
    %1000 = vmatpush.bf16.msra.mxu0 %v661
    %1001 = vmatpush.bf16.msra.mxu0 %v659
    %1002 = vmatpush.bf16.msra.mxu0 %v657
    %1003 = vmatpush.bf16.msra.mxu0 %v655
    %1004 = vmatpush.bf16.msra.mxu0 %v653
    %1005 = vmatpush.bf16.msra.mxu0 %v651
    %1006 = vmatpush.bf16.msra.mxu0 %v649
    %1007 = vmatpush.bf16.msra.mxu0 %v647
    %1008 = vmatmul.bf16.gmra.mxu0 %v90
    %v1009 = vpop.f32.mrf.mxu0
    %v1010 = vadd.f32 %v997, %v1009
    %v1011 = vpop.f32.mrf.mxu0
    %1012 = vdwg.mxu0
    %1013 = vmatpush.bf16.msra.mxu0 %v677
    %1014 = vmatpush.bf16.msra.mxu0 %v675
    %1015 = vmatpush.bf16.msra.mxu0 %v673
    %1016 = vmatpush.bf16.msra.mxu0 %v671
    %1017 = vmatpush.bf16.msra.mxu0 %v669
    %1018 = vmatpush.bf16.msra.mxu0 %v667
    %1019 = vmatpush.bf16.msra.mxu0 %v665
    %1020 = vmatpush.bf16.msra.mxu0 %v663
    %1021 = vmatmul.bf16.gmra.mxu0 %v91
    %v1022 = vpop.f32.mrf.mxu0
    %v1023 = vadd.f32 %v1010, %v1022
    %v1024 = vpop.f32.mrf.mxu0
    %1025 = vdwg.mxu0
    %1026 = vmatpush.bf16.msra.mxu0 %v693
    %1027 = vmatpush.bf16.msra.mxu0 %v691
    %1028 = vmatpush.bf16.msra.mxu0 %v689
    %1029 = vmatpush.bf16.msra.mxu0 %v687
    %1030 = vmatpush.bf16.msra.mxu0 %v685
    %1031 = vmatpush.bf16.msra.mxu0 %v683
    %1032 = vmatpush.bf16.msra.mxu0 %v681
    %1033 = vmatpush.bf16.msra.mxu0 %v679
    %1034 = vmatmul.bf16.gmra.mxu0 %v92
    %v1035 = vpop.f32.mrf.mxu0
    %v1036 = vadd.f32 %v1023, %v1035
    %v1037 = vpop.f32.mrf.mxu0
    %1038 = vdwg.mxu0
    %1039 = vmatpush.bf16.msra.mxu0 %v709
    %1040 = vmatpush.bf16.msra.mxu0 %v707
    %1041 = vmatpush.bf16.msra.mxu0 %v705
    %1042 = vmatpush.bf16.msra.mxu0 %v703
    %1043 = vmatpush.bf16.msra.mxu0 %v701
    %1044 = vmatpush.bf16.msra.mxu0 %v699
    %1045 = vmatpush.bf16.msra.mxu0 %v697
    %1046 = vmatpush.bf16.msra.mxu0 %v695
    %1047 = vmatmul.bf16.gmra.mxu0 %v93
    %v1048 = vpop.f32.mrf.mxu0
    %v1049 = vadd.f32 %v1036, %v1048
    %v1050 = vpop.f32.mrf.mxu0
    %1051 = vdwg.mxu0
    %1052 = vmatpush.bf16.msra.mxu0 %v725
    %1053 = vmatpush.bf16.msra.mxu0 %v723
    %1054 = vmatpush.bf16.msra.mxu0 %v721
    %1055 = vmatpush.bf16.msra.mxu0 %v719
    %1056 = vmatpush.bf16.msra.mxu0 %v717
    %1057 = vmatpush.bf16.msra.mxu0 %v715
    %1058 = vmatpush.bf16.msra.mxu0 %v713
    %1059 = vmatpush.bf16.msra.mxu0 %v711
    %1060 = vmatmul.bf16.gmra.mxu0 %v94
    %v1061 = vpop.f32.mrf.mxu0
    %v1062 = vadd.f32 %v1049, %v1061
    %v1063 = vpop.f32.mrf.mxu0
    %1064 = vdwg.mxu0
    %1065 = vmatpush.bf16.msra.mxu0 %v741
    %1066 = vmatpush.bf16.msra.mxu0 %v739
    %1067 = vmatpush.bf16.msra.mxu0 %v737
    %1068 = vmatpush.bf16.msra.mxu0 %v735
    %1069 = vmatpush.bf16.msra.mxu0 %v733
    %1070 = vmatpush.bf16.msra.mxu0 %v731
    %1071 = vmatpush.bf16.msra.mxu0 %v729
    %1072 = vmatpush.bf16.msra.mxu0 %v727
    %1073 = vmatmul.bf16.gmra.mxu0 %v95
    %v1074 = vpop.f32.mrf.mxu0
    %v1075 = vadd.f32 %v1062, %v1074
    %v1076 = vpop.f32.mrf.mxu0
    %1077 = vdwg.mxu0
    %v1078 = vmul.f32 %v971, 0.5
    %v1079 = vmul.f32 %v1075, 0.5
    %v1080 = vtanh.pop %v1078
    %v1081 = vtanh.pop %v1079
    %v1082 = vadd.f32 %v1080, 1.0
    %v1083 = vadd.f32 %v1081, 1.0
    %v1084 = vmul.f32 %v1082, 0.5
    %v1085 = vmul.f32 %v1083, 0.5
    %v1086 = vpack.c.bf16 %v1084, %v1084
    %v1087 = vpack.c.bf16 %v1085, %v1085
    %v1088 = vld [vmem:[#allocation8] sm:$0xf]
    %v1089 = vld [vmem:[#allocation8 + $0x4] sm:$0xf]
    %v1090 = vld [vmem:[#allocation8 + $0x8] sm:$0xf]
    %v1091 = vld [vmem:[#allocation8 + $0xc] sm:$0xf]
    %v1092 = vld [vmem:[#allocation8 + $0x10] sm:$0xf]
    %v1093 = vld [vmem:[#allocation8 + $0x14] sm:$0xf]
    %v1094 = vld [vmem:[#allocation8 + $0x18] sm:$0xf]
    %v1095 = vld [vmem:[#allocation8 + $0x1c] sm:$0xf]
    %v1096 = vld [vmem:[#allocation8 + $0x20] sm:$0xf]
    %v1097 = vld [vmem:[#allocation8 + $0x24] sm:$0xf]
    %v1098 = vld [vmem:[#allocation8 + $0x28] sm:$0xf]
    %v1099 = vld [vmem:[#allocation8 + $0x2c] sm:$0xf]
    %v1100 = vld [vmem:[#allocation8 + $0x30] sm:$0xf]
    %v1101 = vld [vmem:[#allocation8 + $0x34] sm:$0xf]
    %v1102 = vld [vmem:[#allocation8 + $0x38] sm:$0xf]
    %v1103 = vld [vmem:[#allocation8 + $0x3c] sm:$0xf]
    %v1104 = vld [vmem:[#allocation8 + $0x40] sm:$0xf]
    %v1105 = vld [vmem:[#allocation8 + $0x44] sm:$0xf]
    %v1106 = vld [vmem:[#allocation8 + $0x48] sm:$0xf]
    %v1107 = vld [vmem:[#allocation8 + $0x4c] sm:$0xf]
    %v1108 = vld [vmem:[#allocation8 + $0x50] sm:$0xf]
    %v1109 = vld [vmem:[#allocation8 + $0x54] sm:$0xf]
    %v1110 = vld [vmem:[#allocation8 + $0x58] sm:$0xf]
    %v1111 = vld [vmem:[#allocation8 + $0x5c] sm:$0xf]
    %v1112 = vld [vmem:[#allocation8 + $0x60] sm:$0xf]
    %v1113 = vld [vmem:[#allocation8 + $0x64] sm:$0xf]
    %v1114 = vld [vmem:[#allocation8 + $0x68] sm:$0xf]
    %v1115 = vld [vmem:[#allocation8 + $0x6c] sm:$0xf]
    %v1116 = vld [vmem:[#allocation8 + $0x70] sm:$0xf]
    %v1117 = vld [vmem:[#allocation8 + $0x74] sm:$0xf]
    %v1118 = vld [vmem:[#allocation8 + $0x78] sm:$0xf]
    %v1119 = vld [vmem:[#allocation8 + $0x7c] sm:$0xf]
    %v1120 = vld [vmem:[%s4] sm:$0x1]
    %v1122 = vperm.slane %v1120, 0
    %v1156 = vunpack.c.l.b16 %v1088
    %v1157 = vunpack.c.l.b16 %v1089
    %v1158 = vunpack.c.l.b16 %v1090
    %v1159 = vunpack.c.l.b16 %v1091
    %v1160 = vunpack.c.l.b16 %v1092
    %v1161 = vunpack.c.l.b16 %v1093
    %v1162 = vunpack.c.l.b16 %v1094
    %v1163 = vunpack.c.l.b16 %v1095
    %v1164 = vunpack.c.l.b16 %v1096
    %v1165 = vunpack.c.l.b16 %v1097
    %v1166 = vunpack.c.l.b16 %v1098
    %v1167 = vunpack.c.l.b16 %v1099
    %v1168 = vunpack.c.l.b16 %v1100
    %v1169 = vunpack.c.l.b16 %v1101
    %v1170 = vunpack.c.l.b16 %v1102
    %v1171 = vunpack.c.l.b16 %v1103
    %v1172 = vunpack.c.l.b16 %v1104
    %v1173 = vunpack.c.l.b16 %v1105
    %v1174 = vunpack.c.l.b16 %v1106
    %v1175 = vunpack.c.l.b16 %v1107
    %v1176 = vunpack.c.l.b16 %v1108
    %v1177 = vunpack.c.l.b16 %v1109
    %v1178 = vunpack.c.l.b16 %v1110
    %v1179 = vunpack.c.l.b16 %v1111
    %v1180 = vunpack.c.l.b16 %v1112
    %v1181 = vunpack.c.l.b16 %v1113
    %v1182 = vunpack.c.l.b16 %v1114
    %v1183 = vunpack.c.l.b16 %v1115
    %v1184 = vunpack.c.l.b16 %v1116
    %v1185 = vunpack.c.l.b16 %v1117
    %v1186 = vunpack.c.l.b16 %v1118
    %v1187 = vunpack.c.l.b16 %v1119
    %v1188 = vpack.c.b16 %v1157, %v1156
    %v1189 = vpack.c.b16 %v1159, %v1158
    %v1190 = vpack.c.b16 %v1161, %v1160
    %v1191 = vpack.c.b16 %v1163, %v1162
    %v1192 = vpack.c.b16 %v1165, %v1164
    %v1193 = vpack.c.b16 %v1167, %v1166
    %v1194 = vpack.c.b16 %v1169, %v1168
    %v1195 = vpack.c.b16 %v1171, %v1170
    %v1196 = vpack.c.b16 %v1173, %v1172
    %v1197 = vpack.c.b16 %v1175, %v1174
    %v1198 = vpack.c.b16 %v1177, %v1176
    %v1199 = vpack.c.b16 %v1179, %v1178
    %v1200 = vpack.c.b16 %v1181, %v1180
    %v1201 = vpack.c.b16 %v1183, %v1182
    %v1202 = vpack.c.b16 %v1185, %v1184
    %v1203 = vpack.c.b16 %v1187, %v1186
    %1220 = vmatpush.bf16.msra.mxu0 %v1195
    %1221 = vmatpush.bf16.msra.mxu0 %v1194
    %1222 = vmatpush.bf16.msra.mxu0 %v1193
    %1223 = vmatpush.bf16.msra.mxu0 %v1192
    %1224 = vmatpush.bf16.msra.mxu0 %v1191
    %1225 = vmatpush.bf16.msra.mxu0 %v1190
    %1226 = vmatpush.bf16.msra.mxu0 %v1189
    %1227 = vmatpush.bf16.msra.mxu0 %v1188
    %1228 = vmatmul.bf16.gmra.mxu0 %v1086
    %v1229 = vpop.f32.mrf.mxu0
    %v1230 = vadd.f32 %v1122, %v1229
    %v1231 = vpop.f32.mrf.mxu0
    %1232 = vdwg.mxu0
    %1233 = vmatpush.bf16.msra.mxu0 %v1203
    %1234 = vmatpush.bf16.msra.mxu0 %v1202
    %1235 = vmatpush.bf16.msra.mxu0 %v1201
    %1236 = vmatpush.bf16.msra.mxu0 %v1200
    %1237 = vmatpush.bf16.msra.mxu0 %v1199
    %1238 = vmatpush.bf16.msra.mxu0 %v1198
    %1239 = vmatpush.bf16.msra.mxu0 %v1197
    %1240 = vmatpush.bf16.msra.mxu0 %v1196
    %1241 = vmatmul.bf16.gmra.mxu0 %v1087
    %v1242 = vpop.f32.mrf.mxu0
    %v1243 = vadd.f32 %v1230, %v1242
    %v1244 = vpop.f32.mrf.mxu0
    %1245 = vdwg.mxu0
    %1246 = vmax.xlane.f32.xlu0 %v1243
    %v1247 = vpop.xlane.xlu0 %1246
    %v1248 = vsub.f32 %v1243, %v1247
    %v1249 = vmul.f32 %v1248, 1.442695
    %v1250 = vpow.pop %v1249
    %1251 = vadd.xlane.f32.xlu0 %v1250
    %v1252 = vpop.xlane.xlu0 %1251
    %v1253 = vrcp.pop %v1252
    %v1254 = vmul.f32 %v1252, %v1253
    %v1255 = vsub.f32 1.0, %v1254
    %v1256 = vmul.f32 %v1253, %v1255
    %v1257 = vadd.f32 %v1253, %v1256
    %vm1258 = vweird.f32 %v1252
    %vm1259 = vweird.f32 %v1253
    %vm1260 = vmor %vm1258, %vm1259
    %v1261 = vsel %vm1260, %v1253, %v1257
    %v1262 = vand.u32 2147483647, %v1252
    %vm1263 = vcmp.eq.f32.partialorder %v1262, 8.507059e+37
    %v1264 = vand.u32 %v1252, 2147483648
    %v1265 = vor.u32 1.1754944e-38, %v1264
    %v1266 = vsel %vm1263, %v1265, %v1261
    %v1267 = vmul.f32 %v1250, %v1266
    %1268 = vst [vmem:[#allocation10] sm:$0xff] %v1267
    // Predicated region
    $region38: #{tpu_custom_call.1} parent=1 // pred_check
      _
    $region39: #{tpu_custom_call.1} parent=1 // pred_check_branch
      %1270 = sbr.rel (0) target = $region41
    $region40: #{tpu_custom_call.1} parent=1 // pred_region
      %1272 = vsyncadd [#allocation4], 0
      %s1274 = sshll.u32 [#allocation10], 4
      %s1275 = int_to_ptr.vmem [resolvable:$true] %s1274
      %s1276 = sshll.u32 %s5, 4
      %s1277 = int_to_ptr.hbm [resolvable:$true] %s1276
      %1279 = dma.vmem_to_hbm [thread:$0]  %s1275, 128, %s1277, [#allocation4]
    $region41: #{tpu_custom_call.1} parent=1 // pred_fallthru
      _
    // Predicated region
    $region42: #{tpu_custom_call.1} parent=1 // pred_check
      _
    $region43: #{tpu_custom_call.1} parent=1 // pred_check_branch
      %1281 = sbr.rel (0) target = $region45
    $region44: #{tpu_custom_call.1} parent=1 // pred_region
      %1283 = dma.done [#allocation4], 128
    $region45: #{tpu_custom_call.1} parent=1 // pred_fallthru
      _
    %1284 = vsyncpa [#allocation3], 1
    %1285 = vsyncpa [#allocation6], 1
    %1286 = vsyncpa [#allocation9], 1
    %1287 = vsyncpa [#allocation4], 1

</llo_original>
